<compile_context>
chip_gen: v5e
topology: v5e:2x2
jax: 0.10.0
libtpu: 0.0.40
codegen_flags: <defaults>
</compile_context>

<pallas_src>
import math

import jax
import jax.numpy as jnp
from jax import lax
from jax.experimental import pallas as pl
from jax.experimental.pallas import tpu as pltpu

PAGERANK_ITERS = 10
PAGERANK_DAMPING = 0.85
GATHER_ROWS = 8          # rows gathered per grid step (sublane-dense tiles)


# --------------------------------------------------------------------------- #
# Kernel 1: multi-view node score (lane-dense [1, N] layout)
# --------------------------------------------------------------------------- #
def _mvpool_score_kernel(xt_ref, w_ref, deg_ref, m_ref, ab_ref, va_ref, vb_ref,
                         score_ref):
    # xt_ref  [C, N] VMEM f32 (x transposed -> nodes on lanes)
    # w_ref   [1, C] VMEM f32
    # deg_ref [1, N] VMEM f32
    # m_ref   [N, N] VMEM bf16 (row-normalised adjacency: pr_row_new = pr_row @ M)
    # ab_ref  [2] SMEM (alpha, beta) | va_ref [3, 3] SMEM | vb_ref [3] SMEM
    # score_ref [1, N] VMEM f32 output
    n = deg_ref.shape[1]
    alpha = ab_ref[0]
    beta = ab_ref[1]

    # view 1: degree-based score                                         [1, N]
    s1 = jax.nn.sigmoid(alpha * jnp.log(deg_ref[...] + 1e-16) + beta)

    # view 2: feature projection score (lane-dense MXU mat-vec)          [1, N]
    w = w_ref[...]                                                       # [1,C]
    xw = jnp.dot(w, xt_ref[...], preferred_element_type=jnp.float32)    # [1,N]
    inv_wnorm = lax.rsqrt(jnp.sum(w * w, axis=-1, keepdims=True))       # [1,1]
    s2 = jax.nn.sigmoid(xw * inv_wnorm)

    # view 3: pagerank score via power iteration (bf16 MXU, f32 accumulate)
    # TODO(synk): exact `calc_pagerank_score` is not defined in the module
    # snippet; standard damped pagerank (scaled by N) is used here.
    m = m_ref[...]                                                       # bf16
    pr = jnp.full((1, n), 1.0 / n, dtype=jnp.float32)
    for _ in range(PAGERANK_ITERS):
        pr = (PAGERANK_DAMPING
              * jnp.dot(pr.astype(jnp.bfloat16), m,
                        preferred_element_type=jnp.float32)
              + (1.0 - PAGERANK_DAMPING) / n)
    s3 = jax.nn.sigmoid(pr * n)                                          # [1,N]

    # per-view abs-max normalisation (multiply by approx reciprocal)
    c1 = s1 * pl.reciprocal(jnp.max(jnp.abs(s1), axis=-1, keepdims=True),
                            approx=True)
    c2 = s2 * pl.reciprocal(jnp.max(jnp.abs(s2), axis=-1, keepdims=True),
                            approx=True)
    c3 = s3 * pl.reciprocal(jnp.max(jnp.abs(s3), axis=-1, keepdims=True),
                            approx=True)

    # score_weight = sigmoid(score_cat @ view_att + view_bias); the 3x3 matmul
    # is unrolled with SMEM scalar reads (VPU broadcast, no tiny MXU op).
    w0 = jax.nn.sigmoid(c1 * va_ref[0, 0] + c2 * va_ref[1, 0]
                        + c3 * va_ref[2, 0] + vb_ref[0])
    w1 = jax.nn.sigmoid(c1 * va_ref[0, 1] + c2 * va_ref[1, 1]
                        + c3 * va_ref[2, 1] + vb_ref[1])
    w2 = jax.nn.sigmoid(c1 * va_ref[0, 2] + c2 * va_ref[1, 2]
                        + c3 * va_ref[2, 2] + vb_ref[2])

    # softmax over the 3 views
    mx = jnp.maximum(jnp.maximum(w0, w1), w2)
    e0 = jnp.exp(w0 - mx)
    e1 = jnp.exp(w1 - mx)
    e2 = jnp.exp(w2 - mx)
    inv_z = pl.reciprocal(e0 + e1 + e2, approx=True)

    score_ref[...] = jax.nn.sigmoid((c1 * e0 + c2 * e1 + c3 * e2) * inv_z)


def mvpool_score(x, deg_row, m_bf16, weight, alpha, beta, view_att, view_bias):
    # deg_row [1, N] f32, m_bf16 [N, N] bf16
    n = x.shape[0]
    ab = jnp.concatenate([alpha, beta]).astype(jnp.float32)              # [2]
    x_t = x.astype(jnp.float32).T                                        # [C,N]

    # VMEM budget: bf16 transition + f32 x^T + a handful of [1,N] rows,
    # doubled for double-buffering margin, clamped well below v7x's 64 MiB.
    resident = m_bf16.size * 2 + x_t.size * 4 + 16 * n * 4
    vmem_bytes = max(4 << 20, min(2 * resident + (1 << 20), 48 << 20))

    score = pl.pallas_call(
        _mvpool_score_kernel,
        out_shape=jax.ShapeDtypeStruct((1, n), jnp.float32),
        in_specs=[
            pl.BlockSpec(memory_space=pltpu.MemorySpace.VMEM),   # x^T
            pl.BlockSpec(memory_space=pltpu.MemorySpace.VMEM),   # weight
            pl.BlockSpec(memory_space=pltpu.MemorySpace.VMEM),   # degree row
            pl.BlockSpec(memory_space=pltpu.MemorySpace.VMEM),   # transition bf16
            pl.BlockSpec(memory_space=pltpu.MemorySpace.SMEM),   # (alpha, beta)
            pl.BlockSpec(memory_space=pltpu.MemorySpace.SMEM),   # view_att
            pl.BlockSpec(memory_space=pltpu.MemorySpace.SMEM),   # view_bias
        ],
        out_specs=pl.BlockSpec(memory_space=pltpu.MemorySpace.VMEM),
        compiler_params=pltpu.CompilerParams(vmem_limit_bytes=int(vmem_bytes)),
    )(x_t, weight, deg_row, m_bf16, ab, view_att, view_bias)
    # TODO(synk): for N where an [N,N] bf16 transition no longer fits VMEM
    # (v7x ~64 MiB), the pagerank mat-vec should be tiled over row/column
    # blocks with HBM streaming instead of this single-grid-point design.
    return score.reshape(-1)


# --------------------------------------------------------------------------- #
# Kernel 2: x[perm] * score[perm]   (batched manual-DMA row gather + scale)
# --------------------------------------------------------------------------- #
def _gather_scale_kernel(perm_ref, score_ref, x_hbm, o_ref, xbuf, sems):
    # perm_ref [k_pad] SMEM (scalar prefetch) | score_ref (8, 1) VMEM block
    # x_hbm [N, C] in HBM (memory_space=pl.ANY) | o_ref (8, C) output block
    # xbuf VMEM (8, C) scratch | sems DMA semaphores (8,)
    i = pl.program_id(0)
    base = i * GATHER_ROWS
    # issue all 8 random-row DMAs concurrently (amortises latency)
    for r in range(GATHER_ROWS):
        pltpu.make_async_copy(x_hbm.at[perm_ref[base + r]], xbuf.at[r],
                              sems.at[r]).start()
    for r in range(GATHER_ROWS):
        pltpu.make_async_copy(x_hbm.at[0], xbuf.at[r], sems.at[r]).wait()
    o_ref[...] = (xbuf[...] * score_ref[...]).astype(o_ref.dtype)


def gather_and_scale(x, score, perm):
    n, c = x.shape
    k = perm.shape[0]
    k_pad = ((k + GATHER_ROWS - 1) // GATHER_ROWS) * GATHER_ROWS
    pad = k_pad - k
    perm_p = (jnp.concatenate([perm, jnp.zeros((pad,), jnp.int32)])
              if pad else perm)
    # only the k (padded) needed score scalars travel, gathered in the wrapper
    score_sel = score[perm_p].astype(jnp.float32).reshape(k_pad, 1)

    grid_spec = pltpu.PrefetchScalarGridSpec(
        num_scalar_prefetch=1,
        grid=(k_pad // GATHER_ROWS,),
        in_specs=[
            pl.BlockSpec((GATHER_ROWS, 1), lambda i, perm_ref: (i, 0)),  # score
            pl.BlockSpec(memory_space=pl.ANY),                           # x (HBM)
        ],
        out_specs=pl.BlockSpec((GATHER_ROWS, c), lambda i, perm_ref: (i, 0)),
        scratch_shapes=[
            pltpu.VMEM((GATHER_ROWS, c), x.dtype),
            pltpu.SemaphoreType.DMA((GATHER_ROWS,)),
        ],
    )
    out = pl.pallas_call(
        _gather_scale_kernel,
        out_shape=jax.ShapeDtypeStruct((k_pad, c), x.dtype),
        grid_spec=grid_spec,
        compiler_params=pltpu.CompilerParams(
            dimension_semantics=("parallel",)),
    )(perm_p, score_sel, x)
    return out[:k]


# --------------------------------------------------------------------------- #
# Parameters (deterministic, matching the PyTorch __init__ shapes)
# --------------------------------------------------------------------------- #
def init_params(key, in_channels):
    kw, kv = jax.random.split(key)
    bw = math.sqrt(6.0 / (in_channels + 1))          # xavier_uniform (1, C)
    weight = jax.random.uniform(kw, (1, in_channels), jnp.float32, -bw, bw)
    bv = math.sqrt(6.0 / (3 + 3))                    # xavier_uniform (3, 3)
    view_att = jax.random.uniform(kv, (3, 3), jnp.float32, -bv, bv)
    alpha = jnp.ones((1,), jnp.float32)
    # TODO(synk): `beta` and `view_bias` are used in forward() but never created
    # in __init__; initialised deterministically to zeros here.
    beta = jnp.zeros((1,), jnp.float32)
    view_bias = jnp.zeros((3,), jnp.float32)
    return dict(weight=weight, view_att=view_att, alpha=alpha, beta=beta,
                view_bias=view_bias)


# --------------------------------------------------------------------------- #
# Full MVPool forward
# --------------------------------------------------------------------------- #
def mvpool_forward(params, x, edge_index, edge_attr, ratio, batch=None):
    n = x.shape[0]
    if batch is None:
        batch = jnp.zeros((n,), dtype=jnp.int32)
    row, col = edge_index[0], edge_index[1]

    # degree(row, num_nodes=N)  (scatter-add glue)
    deg = jax.ops.segment_sum(jnp.ones_like(row, dtype=jnp.float32), row,
                              num_segments=n)

    # dense weighted adjacency; row-normalised M so that (lane-dense)
    # pr_row_new = pr_row @ M is exactly trans @ pr_col of the column-stochastic
    # transition matrix.  Cast to bf16 for the MXU power iteration.
    # TODO(synk): dangling nodes (out_deg ~ 0) leak probability mass rather
    # than being redistributed, as in the original approximation.
    a = jnp.zeros((n, n), jnp.float32).at[row, col].add(edge_attr)
    out_deg = jnp.maximum(a.sum(axis=1), 1e-12)
    m_bf16 = (a / out_deg[:, None]).astype(jnp.bfloat16)

    score = mvpool_score(x, deg.reshape(1, n), m_bf16,
                         params["weight"], params["alpha"], params["beta"],
                         params["view_att"], params["view_bias"])

    # top-k node selection.
    # TODO(synk): PyG `topk` selects per graph in `batch`; here a single graph
    # (batch all zeros, the module's `batch is None` default) is assumed.
    k = int(math.ceil(ratio * n))
    _, perm = lax.top_k(score, k)
    perm = perm.astype(jnp.int32)

    x_pool = gather_and_scale(x, score, perm)   # x[perm] * score[perm][:, None]
    batch_pool = batch[perm]

    # filter_adj with static shapes.
    # TODO(synk): PyG filter_adj compacts to a dynamic number of edges; we keep
    # the static [2, E] shape and pad removed edges with -1 (attr set to 0).
    node_mask = jnp.zeros((n,), bool).at[perm].set(True)
    new_idx = jnp.full((n,), -1, jnp.int32).at[perm].set(
        jnp.arange(k, dtype=jnp.int32))
    edge_mask = node_mask[row] & node_mask[col]
    induced_edge_index = jnp.where(edge_mask[None, :],
                                   jnp.stack([new_idx[row], new_idx[col]]),
                                   jnp.int32(-1))
    induced_edge_attr = jnp.where(edge_mask, edge_attr, 0.0)

    return x_pool, induced_edge_index, induced_edge_attr, batch_pool, perm


# --------------------------------------------------------------------------- #
if __name__ == "__main__":
    key = jax.random.PRNGKey(0)
    N, C, E = 16, 128, 48       # nodes, feature channels, edges
    RATIO = 0.5

    k1, k2, k3, k4, k5 = jax.random.split(key, 5)
    x = jax.random.normal(k1, (N, C), jnp.float32)
    row = jax.random.randint(k2, (E,), 0, N, dtype=jnp.int32)
    col = jax.random.randint(k3, (E,), 0, N, dtype=jnp.int32)
    edge_index = jnp.stack([row, col])
    edge_attr = jax.random.uniform(k4, (E,), jnp.float32, 0.1, 1.0)

    params = init_params(k5, C)

    out = mvpool_forward(params, x, edge_index, edge_attr, ratio=RATIO)
    jax.block_until_ready(out)

    x_pool, ind_ei, ind_ea, batch_pool, perm = out
    assert x_pool.shape == (int(math.ceil(RATIO * N)), C)
    assert ind_ei.shape == (2, E)
    assert perm.shape == (int(math.ceil(RATIO * N)),)
    assert bool(jnp.all(jnp.isfinite(x_pool)))
    print("KERNEL_OK")
</pallas_src>

<mosaic_0001>
module attributes {stable_mosaic.version = 11 : i64} {
  func.func @_mvpool_score_kernel(%arg0: memref<128x16xf32, #tpu.memory_space<vmem>>, %arg1: memref<1x128xf32, #tpu.memory_space<vmem>>, %arg2: memref<1x16xf32, #tpu.memory_space<vmem>>, %arg3: memref<16x16xbf16, #tpu.memory_space<vmem>>, %arg4: memref<2xf32, #tpu.memory_space<smem>>, %arg5: memref<3x3xf32, #tpu.memory_space<smem>>, %arg6: memref<3xf32, #tpu.memory_space<smem>>, %arg7: memref<1x16xf32, #tpu.memory_space<vmem>>) attributes {dimension_semantics = [], scalar_prefetch = 0 : i64, scratch_operands = 0 : i64, tpu.core_type = #tpu.core_type<tc>} {
    %c0 = arith.constant 0 : index
    %0 = memref.load %arg4[%c0] : memref<2xf32, #tpu.memory_space<smem>>
    %c1 = arith.constant 1 : index
    %1 = memref.load %arg4[%c1] : memref<2xf32, #tpu.memory_space<smem>>
    %c0_0 = arith.constant 0 : index
    %c0_1 = arith.constant 0 : index
    %2 = vector.load %arg2[%c0_0, %c0_1] : memref<1x16xf32, #tpu.memory_space<vmem>>, vector<1x16xf32>
    %cst = arith.constant 1.000000e-16 : f32
    %3 = vector.broadcast %cst : f32 to vector<1x16xf32>
    %4 = arith.addf %2, %3 : vector<1x16xf32>
    %5 = math.log %4 : vector<1x16xf32>
    %6 = vector.broadcast %0 : f32 to vector<1x16xf32>
    %7 = arith.mulf %6, %5 : vector<1x16xf32>
    %8 = vector.broadcast %1 : f32 to vector<1x16xf32>
    %9 = arith.addf %7, %8 : vector<1x16xf32>
    %10 = arith.negf %9 : vector<1x16xf32>
    %11 = math.exp %10 : vector<1x16xf32>
    %cst_2 = arith.constant 1.000000e+00 : f32
    %12 = vector.broadcast %cst_2 : f32 to vector<1x16xf32>
    %13 = arith.addf %12, %11 : vector<1x16xf32>
    %14 = arith.divf %12, %13 : vector<1x16xf32>
    %c0_3 = arith.constant 0 : index
    %c0_4 = arith.constant 0 : index
    %15 = vector.load %arg1[%c0_3, %c0_4] : memref<1x128xf32, #tpu.memory_space<vmem>>, vector<1x128xf32>
    %c0_5 = arith.constant 0 : index
    %c0_6 = arith.constant 0 : index
    %16 = vector.load %arg0[%c0_5, %c0_6] : memref<128x16xf32, #tpu.memory_space<vmem>>, vector<128x16xf32>
    %cst_7 = arith.constant dense<0.000000e+00> : vector<1x16xf32>
    %17 = tpu.matmul %15, %16, %cst_7 {dimension_numbers = #tpu.dot_dimension_numbers<[1], [0], [0], [1], [0, 0, 1, 1], [], []>} : vector<1x128xf32>, vector<128x16xf32>, vector<1x16xf32> -> vector<1x16xf32>
    %18 = arith.mulf %15, %15 : vector<1x128xf32>
    %cst_8 = arith.constant dense<0.000000e+00> : vector<1xf32>
    %19 = vector.multi_reduction <add>, %18, %cst_8 [1] : vector<1x128xf32> to vector<1xf32>
    %20 = vector.shape_cast %19 : vector<1xf32> to vector<1x1xf32>
    %21 = math.rsqrt %20 : vector<1x1xf32>
    %22 = vector.broadcast %21 : vector<1x1xf32> to vector<1x16xf32>
    %23 = arith.mulf %17, %22 : vector<1x16xf32>
    %24 = arith.negf %23 : vector<1x16xf32>
    %25 = math.exp %24 : vector<1x16xf32>
    %cst_9 = arith.constant 1.000000e+00 : f32
    %26 = vector.broadcast %cst_9 : f32 to vector<1x16xf32>
    %27 = arith.addf %26, %25 : vector<1x16xf32>
    %28 = arith.divf %26, %27 : vector<1x16xf32>
    %c0_10 = arith.constant 0 : index
    %c0_11 = arith.constant 0 : index
    %29 = vector.load %arg3[%c0_10, %c0_11] : memref<16x16xbf16, #tpu.memory_space<vmem>>, vector<16x16xbf16>
    %cst_12 = arith.constant 6.250000e-02 : f32
    %30 = vector.broadcast %cst_12 : f32 to vector<1x16xf32>
    %31 = arith.truncf %30 : vector<1x16xf32> to vector<1x16xbf16>
    %cst_13 = arith.constant dense<0.000000e+00> : vector<1x16xf32>
    %32 = tpu.matmul %31, %29, %cst_13 {dimension_numbers = #tpu.dot_dimension_numbers<[1], [0], [0], [1], [0, 0, 1, 1], [], []>} : vector<1x16xbf16>, vector<16x16xbf16>, vector<1x16xf32> -> vector<1x16xf32>
    %cst_14 = arith.constant 8.500000e-01 : f32
    %33 = vector.broadcast %cst_14 : f32 to vector<1x16xf32>
    %34 = arith.mulf %33, %32 : vector<1x16xf32>
    %cst_15 = arith.constant 9.375000e-03 : f32
    %35 = vector.broadcast %cst_15 : f32 to vector<1x16xf32>
    %36 = arith.addf %34, %35 : vector<1x16xf32>
    %37 = arith.truncf %36 : vector<1x16xf32> to vector<1x16xbf16>
    %cst_16 = arith.constant dense<0.000000e+00> : vector<1x16xf32>
    %38 = tpu.matmul %37, %29, %cst_16 {dimension_numbers = #tpu.dot_dimension_numbers<[1], [0], [0], [1], [0, 0, 1, 1], [], []>} : vector<1x16xbf16>, vector<16x16xbf16>, vector<1x16xf32> -> vector<1x16xf32>
    %cst_17 = arith.constant 8.500000e-01 : f32
    %39 = vector.broadcast %cst_17 : f32 to vector<1x16xf32>
    %40 = arith.mulf %39, %38 : vector<1x16xf32>
    %cst_18 = arith.constant 9.375000e-03 : f32
    %41 = vector.broadcast %cst_18 : f32 to vector<1x16xf32>
    %42 = arith.addf %40, %41 : vector<1x16xf32>
    %43 = arith.truncf %42 : vector<1x16xf32> to vector<1x16xbf16>
    %cst_19 = arith.constant dense<0.000000e+00> : vector<1x16xf32>
    %44 = tpu.matmul %43, %29, %cst_19 {dimension_numbers = #tpu.dot_dimension_numbers<[1], [0], [0], [1], [0, 0, 1, 1], [], []>} : vector<1x16xbf16>, vector<16x16xbf16>, vector<1x16xf32> -> vector<1x16xf32>
    %cst_20 = arith.constant 8.500000e-01 : f32
    %45 = vector.broadcast %cst_20 : f32 to vector<1x16xf32>
    %46 = arith.mulf %45, %44 : vector<1x16xf32>
    %cst_21 = arith.constant 9.375000e-03 : f32
    %47 = vector.broadcast %cst_21 : f32 to vector<1x16xf32>
    %48 = arith.addf %46, %47 : vector<1x16xf32>
    %49 = arith.truncf %48 : vector<1x16xf32> to vector<1x16xbf16>
    %cst_22 = arith.constant dense<0.000000e+00> : vector<1x16xf32>
    %50 = tpu.matmul %49, %29, %cst_22 {dimension_numbers = #tpu.dot_dimension_numbers<[1], [0], [0], [1], [0, 0, 1, 1], [], []>} : vector<1x16xbf16>, vector<16x16xbf16>, vector<1x16xf32> -> vector<1x16xf32>
    %cst_23 = arith.constant 8.500000e-01 : f32
    %51 = vector.broadcast %cst_23 : f32 to vector<1x16xf32>
    %52 = arith.mulf %51, %50 : vector<1x16xf32>
    %cst_24 = arith.constant 9.375000e-03 : f32
    %53 = vector.broadcast %cst_24 : f32 to vector<1x16xf32>
    %54 = arith.addf %52, %53 : vector<1x16xf32>
    %55 = arith.truncf %54 : vector<1x16xf32> to vector<1x16xbf16>
    %cst_25 = arith.constant dense<0.000000e+00> : vector<1x16xf32>
    %56 = tpu.matmul %55, %29, %cst_25 {dimension_numbers = #tpu.dot_dimension_numbers<[1], [0], [0], [1], [0, 0, 1, 1], [], []>} : vector<1x16xbf16>, vector<16x16xbf16>, vector<1x16xf32> -> vector<1x16xf32>
    %cst_26 = arith.constant 8.500000e-01 : f32
    %57 = vector.broadcast %cst_26 : f32 to vector<1x16xf32>
    %58 = arith.mulf %57, %56 : vector<1x16xf32>
    %cst_27 = arith.constant 9.375000e-03 : f32
    %59 = vector.broadcast %cst_27 : f32 to vector<1x16xf32>
    %60 = arith.addf %58, %59 : vector<1x16xf32>
    %61 = arith.truncf %60 : vector<1x16xf32> to vector<1x16xbf16>
    %cst_28 = arith.constant dense<0.000000e+00> : vector<1x16xf32>
    %62 = tpu.matmul %61, %29, %cst_28 {dimension_numbers = #tpu.dot_dimension_numbers<[1], [0], [0], [1], [0, 0, 1, 1], [], []>} : vector<1x16xbf16>, vector<16x16xbf16>, vector<1x16xf32> -> vector<1x16xf32>
    %cst_29 = arith.constant 8.500000e-01 : f32
    %63 = vector.broadcast %cst_29 : f32 to vector<1x16xf32>
    %64 = arith.mulf %63, %62 : vector<1x16xf32>
    %cst_30 = arith.constant 9.375000e-03 : f32
    %65 = vector.broadcast %cst_30 : f32 to vector<1x16xf32>
    %66 = arith.addf %64, %65 : vector<1x16xf32>
    %67 = arith.truncf %66 : vector<1x16xf32> to vector<1x16xbf16>
    %cst_31 = arith.constant dense<0.000000e+00> : vector<1x16xf32>
    %68 = tpu.matmul %67, %29, %cst_31 {dimension_numbers = #tpu.dot_dimension_numbers<[1], [0], [0], [1], [0, 0, 1, 1], [], []>} : vector<1x16xbf16>, vector<16x16xbf16>, vector<1x16xf32> -> vector<1x16xf32>
    %cst_32 = arith.constant 8.500000e-01 : f32
    %69 = vector.broadcast %cst_32 : f32 to vector<1x16xf32>
    %70 = arith.mulf %69, %68 : vector<1x16xf32>
    %cst_33 = arith.constant 9.375000e-03 : f32
    %71 = vector.broadcast %cst_33 : f32 to vector<1x16xf32>
    %72 = arith.addf %70, %71 : vector<1x16xf32>
    %73 = arith.truncf %72 : vector<1x16xf32> to vector<1x16xbf16>
    %cst_34 = arith.constant dense<0.000000e+00> : vector<1x16xf32>
    %74 = tpu.matmul %73, %29, %cst_34 {dimension_numbers = #tpu.dot_dimension_numbers<[1], [0], [0], [1], [0, 0, 1, 1], [], []>} : vector<1x16xbf16>, vector<16x16xbf16>, vector<1x16xf32> -> vector<1x16xf32>
    %cst_35 = arith.constant 8.500000e-01 : f32
    %75 = vector.broadcast %cst_35 : f32 to vector<1x16xf32>
    %76 = arith.mulf %75, %74 : vector<1x16xf32>
    %cst_36 = arith.constant 9.375000e-03 : f32
    %77 = vector.broadcast %cst_36 : f32 to vector<1x16xf32>
    %78 = arith.addf %76, %77 : vector<1x16xf32>
    %79 = arith.truncf %78 : vector<1x16xf32> to vector<1x16xbf16>
    %cst_37 = arith.constant dense<0.000000e+00> : vector<1x16xf32>
    %80 = tpu.matmul %79, %29, %cst_37 {dimension_numbers = #tpu.dot_dimension_numbers<[1], [0], [0], [1], [0, 0, 1, 1], [], []>} : vector<1x16xbf16>, vector<16x16xbf16>, vector<1x16xf32> -> vector<1x16xf32>
    %cst_38 = arith.constant 8.500000e-01 : f32
    %81 = vector.broadcast %cst_38 : f32 to vector<1x16xf32>
    %82 = arith.mulf %81, %80 : vector<1x16xf32>
    %cst_39 = arith.constant 9.375000e-03 : f32
    %83 = vector.broadcast %cst_39 : f32 to vector<1x16xf32>
    %84 = arith.addf %82, %83 : vector<1x16xf32>
    %85 = arith.truncf %84 : vector<1x16xf32> to vector<1x16xbf16>
    %cst_40 = arith.constant dense<0.000000e+00> : vector<1x16xf32>
    %86 = tpu.matmul %85, %29, %cst_40 {dimension_numbers = #tpu.dot_dimension_numbers<[1], [0], [0], [1], [0, 0, 1, 1], [], []>} : vector<1x16xbf16>, vector<16x16xbf16>, vector<1x16xf32> -> vector<1x16xf32>
    %cst_41 = arith.constant 8.500000e-01 : f32
    %87 = vector.broadcast %cst_41 : f32 to vector<1x16xf32>
    %88 = arith.mulf %87, %86 : vector<1x16xf32>
    %cst_42 = arith.constant 9.375000e-03 : f32
    %89 = vector.broadcast %cst_42 : f32 to vector<1x16xf32>
    %90 = arith.addf %88, %89 : vector<1x16xf32>
    %cst_43 = arith.constant 1.600000e+01 : f32
    %91 = vector.broadcast %cst_43 : f32 to vector<1x16xf32>
    %92 = arith.mulf %90, %91 : vector<1x16xf32>
    %93 = arith.negf %92 : vector<1x16xf32>
    %94 = math.exp %93 : vector<1x16xf32>
    %cst_44 = arith.constant 1.000000e+00 : f32
    %95 = vector.broadcast %cst_44 : f32 to vector<1x16xf32>
    %96 = arith.addf %95, %94 : vector<1x16xf32>
    %97 = arith.divf %95, %96 : vector<1x16xf32>
    %98 = math.absf %14 : vector<1x16xf32>
    %cst_45 = arith.constant dense<0xFF800000> : vector<1xf32>
    %99 = vector.multi_reduction <maximumf>, %98, %cst_45 [1] : vector<1x16xf32> to vector<1xf32>
    %100 = vector.shape_cast %99 : vector<1xf32> to vector<1x1xf32>
    %101 = tpu.reciprocal %100 {approx = true} : vector<1x1xf32> -> vector<1x1xf32>
    %102 = vector.broadcast %101 : vector<1x1xf32> to vector<1x16xf32>
    %103 = arith.mulf %14, %102 : vector<1x16xf32>
    %104 = math.absf %28 : vector<1x16xf32>
    %cst_46 = arith.constant dense<0xFF800000> : vector<1xf32>
    %105 = vector.multi_reduction <maximumf>, %104, %cst_46 [1] : vector<1x16xf32> to vector<1xf32>
    %106 = vector.shape_cast %105 : vector<1xf32> to vector<1x1xf32>
    %107 = tpu.reciprocal %106 {approx = true} : vector<1x1xf32> -> vector<1x1xf32>
    %108 = vector.broadcast %107 : vector<1x1xf32> to vector<1x16xf32>
    %109 = arith.mulf %28, %108 : vector<1x16xf32>
    %110 = math.absf %97 : vector<1x16xf32>
    %cst_47 = arith.constant dense<0xFF800000> : vector<1xf32>
    %111 = vector.multi_reduction <maximumf>, %110, %cst_47 [1] : vector<1x16xf32> to vector<1xf32>
    %112 = vector.shape_cast %111 : vector<1xf32> to vector<1x1xf32>
    %113 = tpu.reciprocal %112 {approx = true} : vector<1x1xf32> -> vector<1x1xf32>
    %114 = vector.broadcast %113 : vector<1x1xf32> to vector<1x16xf32>
    %115 = arith.mulf %97, %114 : vector<1x16xf32>
    %c0_48 = arith.constant 0 : index
    %c0_49 = arith.constant 0 : index
    %116 = memref.load %arg5[%c0_48, %c0_49] : memref<3x3xf32, #tpu.memory_space<smem>>
    %117 = vector.broadcast %116 : f32 to vector<1x16xf32>
    %118 = arith.mulf %103, %117 : vector<1x16xf32>
    %c1_50 = arith.constant 1 : index
    %c0_51 = arith.constant 0 : index
    %119 = memref.load %arg5[%c1_50, %c0_51] : memref<3x3xf32, #tpu.memory_space<smem>>
    %120 = vector.broadcast %119 : f32 to vector<1x16xf32>
    %121 = arith.mulf %109, %120 : vector<1x16xf32>
    %122 = arith.addf %118, %121 : vector<1x16xf32>
    %c2 = arith.constant 2 : index
    %c0_52 = arith.constant 0 : index
    %123 = memref.load %arg5[%c2, %c0_52] : memref<3x3xf32, #tpu.memory_space<smem>>
    %124 = vector.broadcast %123 : f32 to vector<1x16xf32>
    %125 = arith.mulf %115, %124 : vector<1x16xf32>
    %126 = arith.addf %122, %125 : vector<1x16xf32>
    %c0_53 = arith.constant 0 : index
    %127 = memref.load %arg6[%c0_53] : memref<3xf32, #tpu.memory_space<smem>>
    %128 = vector.broadcast %127 : f32 to vector<1x16xf32>
    %129 = arith.addf %126, %128 : vector<1x16xf32>
    %130 = arith.negf %129 : vector<1x16xf32>
    %131 = math.exp %130 : vector<1x16xf32>
    %cst_54 = arith.constant 1.000000e+00 : f32
    %132 = vector.broadcast %cst_54 : f32 to vector<1x16xf32>
    %133 = arith.addf %132, %131 : vector<1x16xf32>
    %134 = arith.divf %132, %133 : vector<1x16xf32>
    %c0_55 = arith.constant 0 : index
    %c1_56 = arith.constant 1 : index
    %135 = memref.load %arg5[%c0_55, %c1_56] : memref<3x3xf32, #tpu.memory_space<smem>>
    %136 = vector.broadcast %135 : f32 to vector<1x16xf32>
    %137 = arith.mulf %103, %136 : vector<1x16xf32>
    %c1_57 = arith.constant 1 : index
    %c1_58 = arith.constant 1 : index
    %138 = memref.load %arg5[%c1_57, %c1_58] : memref<3x3xf32, #tpu.memory_space<smem>>
    %139 = vector.broadcast %138 : f32 to vector<1x16xf32>
    %140 = arith.mulf %109, %139 : vector<1x16xf32>
    %141 = arith.addf %137, %140 : vector<1x16xf32>
    %c2_59 = arith.constant 2 : index
    %c1_60 = arith.constant 1 : index
    %142 = memref.load %arg5[%c2_59, %c1_60] : memref<3x3xf32, #tpu.memory_space<smem>>
    %143 = vector.broadcast %142 : f32 to vector<1x16xf32>
    %144 = arith.mulf %115, %143 : vector<1x16xf32>
    %145 = arith.addf %141, %144 : vector<1x16xf32>
    %c1_61 = arith.constant 1 : index
    %146 = memref.load %arg6[%c1_61] : memref<3xf32, #tpu.memory_space<smem>>
    %147 = vector.broadcast %146 : f32 to vector<1x16xf32>
    %148 = arith.addf %145, %147 : vector<1x16xf32>
    %149 = arith.negf %148 : vector<1x16xf32>
    %150 = math.exp %149 : vector<1x16xf32>
    %cst_62 = arith.constant 1.000000e+00 : f32
    %151 = vector.broadcast %cst_62 : f32 to vector<1x16xf32>
    %152 = arith.addf %151, %150 : vector<1x16xf32>
    %153 = arith.divf %151, %152 : vector<1x16xf32>
    %c0_63 = arith.constant 0 : index
    %c2_64 = arith.constant 2 : index
    %154 = memref.load %arg5[%c0_63, %c2_64] : memref<3x3xf32, #tpu.memory_space<smem>>
    %155 = vector.broadcast %154 : f32 to vector<1x16xf32>
    %156 = arith.mulf %103, %155 : vector<1x16xf32>
    %c1_65 = arith.constant 1 : index
    %c2_66 = arith.constant 2 : index
    %157 = memref.load %arg5[%c1_65, %c2_66] : memref<3x3xf32, #tpu.memory_space<smem>>
    %158 = vector.broadcast %157 : f32 to vector<1x16xf32>
    %159 = arith.mulf %109, %158 : vector<1x16xf32>
    %160 = arith.addf %156, %159 : vector<1x16xf32>
    %c2_67 = arith.constant 2 : index
    %c2_68 = arith.constant 2 : index
    %161 = memref.load %arg5[%c2_67, %c2_68] : memref<3x3xf32, #tpu.memory_space<smem>>
    %162 = vector.broadcast %161 : f32 to vector<1x16xf32>
    %163 = arith.mulf %115, %162 : vector<1x16xf32>
    %164 = arith.addf %160, %163 : vector<1x16xf32>
    %c2_69 = arith.constant 2 : index
    %165 = memref.load %arg6[%c2_69] : memref<3xf32, #tpu.memory_space<smem>>
    %166 = vector.broadcast %165 : f32 to vector<1x16xf32>
    %167 = arith.addf %164, %166 : vector<1x16xf32>
    %168 = arith.negf %167 : vector<1x16xf32>
    %169 = math.exp %168 : vector<1x16xf32>
    %cst_70 = arith.constant 1.000000e+00 : f32
    %170 = vector.broadcast %cst_70 : f32 to vector<1x16xf32>
    %171 = arith.addf %170, %169 : vector<1x16xf32>
    %172 = arith.divf %170, %171 : vector<1x16xf32>
    %173 = arith.maximumf %134, %153 : vector<1x16xf32>
    %174 = arith.maximumf %173, %172 : vector<1x16xf32>
    %175 = arith.subf %134, %174 : vector<1x16xf32>
    %176 = math.exp %175 : vector<1x16xf32>
    %177 = arith.subf %153, %174 : vector<1x16xf32>
    %178 = math.exp %177 : vector<1x16xf32>
    %179 = arith.subf %172, %174 : vector<1x16xf32>
    %180 = math.exp %179 : vector<1x16xf32>
    %181 = arith.addf %176, %178 : vector<1x16xf32>
    %182 = arith.addf %181, %180 : vector<1x16xf32>
    %183 = tpu.reciprocal %182 {approx = true} : vector<1x16xf32> -> vector<1x16xf32>
    %184 = arith.mulf %103, %176 : vector<1x16xf32>
    %185 = arith.mulf %109, %178 : vector<1x16xf32>
    %186 = arith.addf %184, %185 : vector<1x16xf32>
    %187 = arith.mulf %115, %180 : vector<1x16xf32>
    %188 = arith.addf %186, %187 : vector<1x16xf32>
    %189 = arith.mulf %188, %183 : vector<1x16xf32>
    %190 = arith.negf %189 : vector<1x16xf32>
    %191 = math.exp %190 : vector<1x16xf32>
    %cst_71 = arith.constant 1.000000e+00 : f32
    %192 = vector.broadcast %cst_71 : f32 to vector<1x16xf32>
    %193 = arith.addf %192, %191 : vector<1x16xf32>
    %194 = arith.divf %192, %193 : vector<1x16xf32>
    %c0_72 = arith.constant 0 : index
    %c0_73 = arith.constant 0 : index
    %195 = vector.load %arg7[%c0_72, %c0_73] : memref<1x16xf32, #tpu.memory_space<vmem>>, vector<1x16xf32>
    tpu.vector_store %arg7[%c0_72, %c0_73], %194 {strides = array<i32>} : memref<1x16xf32, #tpu.memory_space<vmem>>, vector<1x16xf32>,
    return
  }
}

</mosaic_0001>

<llo_original>
// kernel: tpu_custom_call.1
$region0: #{tpu_custom_call.1}
  #allocation0 [shape = 'u32[]', space=smem, size = 0x4, offset = 0x4, fixed_abs, tag = 'smem constant byte address 0x4 - core index']
  #allocation1 [shape = 'u32[72,128]{1,0:T(1,128)}', space=vmem, size = 0x9000, scoped, tag = 'internal scratch']
  %s0 = inlined_call_operand.vmem [shape: f32[128,16], index: 0, kind: input, shape index: {}]
  %s1 = inlined_call_operand.vmem [shape: f32[1,128], index: 1, kind: input, shape index: {}]
  %s2 = inlined_call_operand.vmem [shape: f32[1,16], index: 2, kind: input, shape index: {}]
  %s3 = inlined_call_operand.vmem [shape: bf16[16,16], index: 3, kind: input, shape index: {}]
  %s4 = inlined_call_operand.vmem [shape: f32[2], index: 4, kind: input, shape index: {}]
  %s5 = inlined_call_operand.vmem [shape: f32[3,3], index: 5, kind: input, shape index: {}]
  %s6 = inlined_call_operand.vmem [shape: f32[3], index: 6, kind: input, shape index: {}]
  %s7 = inlined_call_operand.hbm [shape: f32[1,16], index: 7, kind: output, shape index: {}]
  %s8 = sld [smem:[#allocation0]]
  $region50: #{tpu_custom_call.1} parent=0
    _
  %s10 = ssub.s32 1, %s8
  %s11 = scalar_select 0, %s10, %s8
  $region1: #{tpu_custom_call.1} parent=0
    #allocation2 [shape = 'u8[512]{0}', space=smem, size = 0x200, scoped, tag = 'input window, operand 4, single buffered']
    #allocation3 [shape = 's32[1]{0}', space=sflag, size = 0x4, scoped, tag = 'scoped memory for tpu_custom_call.1']
    #allocation4 [shape = 's32[1]{0}', space=sflag, size = 0x4, scoped, tag = 'scoped memory for tpu_custom_call.1']
    #allocation5 [shape = 'u8[2048]{0}', space=smem, size = 0x800, scoped, tag = 'input window, operand 5, single buffered']
    #allocation6 [shape = 's32[1]{0}', space=sflag, size = 0x4, scoped, tag = 'scoped memory for tpu_custom_call.1']
    #allocation7 [shape = 'u8[512]{0}', space=smem, size = 0x200, scoped, tag = 'input window, operand 6, single buffered']
    #allocation8 [shape = 'u8[512]{0}', space=vmem, size = 0x400, scoped, tag = 'output window, operand 0, single buffered']
    %12 = vsyncpa [#allocation4], 0
    %13 = vsyncpa [#allocation6], 0
    %14 = vsyncpa [#allocation3], 0
    // Predicated region
    $region2: #{tpu_custom_call.1} parent=1 // pred_check
      _
    $region3: #{tpu_custom_call.1} parent=1 // pred_check_branch
      %16 = sbr.rel (0) target = $region5
    $region4: #{tpu_custom_call.1} parent=1 // pred_region
      _
    $region5: #{tpu_custom_call.1} parent=1 // pred_fallthru
      _
    // Predicated region
    $region6: #{tpu_custom_call.1} parent=1 // pred_check
      _
    $region7: #{tpu_custom_call.1} parent=1 // pred_check_branch
      %18 = sbr.rel (0) target = $region9
    $region8: #{tpu_custom_call.1} parent=1 // pred_region
      _
    $region9: #{tpu_custom_call.1} parent=1 // pred_fallthru
      _
    // Predicated region
    $region10: #{tpu_custom_call.1} parent=1 // pred_check
      _
    $region11: #{tpu_custom_call.1} parent=1 // pred_check_branch
      %20 = sbr.rel (0) target = $region13
    $region12: #{tpu_custom_call.1} parent=1 // pred_region
      _
    $region13: #{tpu_custom_call.1} parent=1 // pred_fallthru
      _
    // Predicated region
    $region14: #{tpu_custom_call.1} parent=1 // pred_check
      _
    $region15: #{tpu_custom_call.1} parent=1 // pred_check_branch
      %22 = sbr.rel (0) target = $region17
    $region16: #{tpu_custom_call.1} parent=1 // pred_region
      _
    $region17: #{tpu_custom_call.1} parent=1 // pred_fallthru
      _
    // Predicated region
    $region18: #{tpu_custom_call.1} parent=1 // pred_check
      _
    $region19: #{tpu_custom_call.1} parent=1 // pred_check_branch
      %24 = sbr.rel (0) target = $region21
    $region20: #{tpu_custom_call.1} parent=1 // pred_region
      %26 = vsyncadd [#allocation4], 0
      %s28 = sshll.u32 %s4, 4
      %s29 = int_to_ptr.vmem [resolvable:$true] %s28
      %31 = dma.vmem_to_smem %s29, 16, [#allocation2], [#allocation4]
    $region21: #{tpu_custom_call.1} parent=1 // pred_fallthru
      _
    // Predicated region
    $region22: #{tpu_custom_call.1} parent=1 // pred_check
      _
    $region23: #{tpu_custom_call.1} parent=1 // pred_check_branch
      %33 = sbr.rel (0) target = $region25
    $region24: #{tpu_custom_call.1} parent=1 // pred_region
      %35 = vsyncadd [#allocation6], 0
      %s37 = sshll.u32 %s5, 4
      %s38 = int_to_ptr.vmem [resolvable:$true] %s37
      %40 = dma.vmem_to_smem %s38, 64, [#allocation5], [#allocation6]
    $region25: #{tpu_custom_call.1} parent=1 // pred_fallthru
      _
    // Predicated region
    $region26: #{tpu_custom_call.1} parent=1 // pred_check
      _
    $region27: #{tpu_custom_call.1} parent=1 // pred_check_branch
      %42 = sbr.rel (0) target = $region29
    $region28: #{tpu_custom_call.1} parent=1 // pred_region
      %44 = vsyncadd [#allocation6], 0
      %s46 = sshll.u32 %s6, 4
      %s47 = int_to_ptr.vmem [resolvable:$true] %s46
      %49 = dma.vmem_to_smem %s47, 16, [#allocation7], [#allocation6]
    $region29: #{tpu_custom_call.1} parent=1 // pred_fallthru
      _
    // Predicated region
    $region30: #{tpu_custom_call.1} parent=1 // pred_check
      _
    $region31: #{tpu_custom_call.1} parent=1 // pred_check_branch
      %51 = sbr.rel (0) target = $region33
    $region32: #{tpu_custom_call.1} parent=1 // pred_region
      %53 = dma.done [#allocation4], 16
    $region33: #{tpu_custom_call.1} parent=1 // pred_fallthru
      _
    // Predicated region
    $region34: #{tpu_custom_call.1} parent=1 // pred_check
      _
    $region35: #{tpu_custom_call.1} parent=1 // pred_check_branch
      %55 = sbr.rel (0) target = $region37
    $region36: #{tpu_custom_call.1} parent=1 // pred_region
      %57 = dma.done [#allocation6], 64
    $region37: #{tpu_custom_call.1} parent=1 // pred_fallthru
      _
    // Predicated region
    $region38: #{tpu_custom_call.1} parent=1 // pred_check
      _
    $region39: #{tpu_custom_call.1} parent=1 // pred_check_branch
      %59 = sbr.rel (0) target = $region41
    $region40: #{tpu_custom_call.1} parent=1 // pred_region
      %61 = dma.done [#allocation6], 16
    $region41: #{tpu_custom_call.1} parent=1 // pred_fallthru
      _
    %62 = sfence
    %s65 = sld [smem:[#allocation2]]
    %s66 = sld [smem:[#allocation2 + $0x1]]
    %v67 = vld [vmem:[%s2] sm:$0x1]
    %v68 = vadd.f32 %v67, 1e-16
    %v69 = vlog2.pop %v68
    %v70 = vmul.f32 %v69, 0.6931472
    %v71 = vstv %s65
    %v72 = vmul.f32 %v71, %v70
    %v73 = vstv %s66
    %v74 = vadd.f32 %v72, %v73
    %v75 = vxor.u32 %v74, 2147483648
    %v76 = vmul.f32 %v75, 1.442695
    %v77 = vpow.pop %v76
    %v78 = vadd.f32 %v77, 1.0
    %v79 = vrcp.pop %v78
    %v80 = vmul.f32 %v78, %v79
    %v81 = vsub.f32 1.0, %v80
    %v82 = vmul.f32 %v79, %v81
    %v83 = vadd.f32 %v79, %v82
    %vm84 = vweird.f32 %v78
    %vm85 = vweird.f32 %v79
    %vm86 = vmor %vm84, %vm85
    %v87 = vsel %vm86, %v79, %v83
    %v88 = vand.u32 2147483647, %v78
    %vm89 = vcmp.eq.f32.partialorder %v88, 8.507059e+37
    %v90 = vand.u32 %v78, 2147483648
    %v91 = vor.u32 1.1754944e-38, %v90
    %v92 = vsel %vm89, %v91, %v87
    %v93 = vmul.f32 1.0, %v92
    %v94 = vld [vmem:[%s1] sm:$0x1]
    %v95 = vld [vmem:[%s0] sm:$0xff]
    %v96 = vld [vmem:[%s0 + $0x8] sm:$0xff]
    %v97 = vld [vmem:[%s0 + $0x10] sm:$0xff]
    %v98 = vld [vmem:[%s0 + $0x18] sm:$0xff]
    %v99 = vld [vmem:[%s0 + $0x20] sm:$0xff]
    %v100 = vld [vmem:[%s0 + $0x28] sm:$0xff]
    %v101 = vld [vmem:[%s0 + $0x30] sm:$0xff]
    %v102 = vld [vmem:[%s0 + $0x38] sm:$0xff]
    %v103 = vld [vmem:[%s0 + $0x40] sm:$0xff]
    %v104 = vld [vmem:[%s0 + $0x48] sm:$0xff]
    %v105 = vld [vmem:[%s0 + $0x50] sm:$0xff]
    %v106 = vld [vmem:[%s0 + $0x58] sm:$0xff]
    %v107 = vld [vmem:[%s0 + $0x60] sm:$0xff]
    %v108 = vld [vmem:[%s0 + $0x68] sm:$0xff]
    %v109 = vld [vmem:[%s0 + $0x70] sm:$0xff]
    %v110 = vld [vmem:[%s0 + $0x78] sm:$0xff]
    %111 = vmatpush.msra.mxu0 %v110
    %112 = vmatpush.msra.mxu0 %v109
    %113 = vmatpush.msra.mxu0 %v108
    %114 = vmatpush.msra.mxu0 %v107
    %115 = vmatpush.msra.mxu0 %v106
    %116 = vmatpush.msra.mxu0 %v105
    %117 = vmatpush.msra.mxu0 %v104
    %118 = vmatpush.msra.mxu0 %v103
    %119 = vmatpush.msra.mxu0 %v102
    %120 = vmatpush.msra.mxu0 %v101
    %121 = vmatpush.msra.mxu0 %v100
    %122 = vmatpush.msra.mxu0 %v99
    %123 = vmatpush.msra.mxu0 %v98
    %124 = vmatpush.msra.mxu0 %v97
    %125 = vmatpush.msra.mxu0 %v96
    %126 = vmatpush.msra.mxu0 %v95
    %127 = vmatmul.f32.gmra.mxu0 %v94
    %v128 = vpop.f32.mrf.mxu0
    %v129 = vadd.f32 0.0, %v128
    %130 = vdwg.mxu0
    %v131 = vmul.f32 %v94, %v94
    %vm132 = vcmask 1040384
    %v133 = vsel %vm132, %v131, 0.0
    %134 = vadd.xlane.f32.xlu0 %v133
    %v135 = vpop.xlane.xlu0 %134
    %v136 = vrsqrt.pop %v135
    %v137 = vmul.f32 %v136, %v135
    %v138 = vmul.f32 %v137, %v136
    %v139 = vmul.f32 0.5, %v138
    %v140 = vsub.f32 1.5, %v139
    %v141 = vmul.f32 %v136, %v140
    %vm142 = vweird.f32 %v135
    %vm143 = vweird.f32 %v136
    %vm144 = vmor %vm142, %vm143
    %v145 = vsel %vm144, %v136, %v141
    %v146 = vmul.f32 %v129, %v145
    %v147 = vxor.u32 %v146, 2147483648
    %v148 = vmul.f32 %v147, 1.442695
    %v149 = vpow.pop %v148
    %v150 = vadd.f32 %v149, 1.0
    %v151 = vrcp.pop %v150
    %v152 = vmul.f32 %v150, %v151
    %v153 = vsub.f32 1.0, %v152
    %v154 = vmul.f32 %v151, %v153
    %v155 = vadd.f32 %v151, %v154
    %vm156 = vweird.f32 %v150
    %vm157 = vweird.f32 %v151
    %vm158 = vmor %vm156, %vm157
    %v159 = vsel %vm158, %v151, %v155
    %v160 = vand.u32 2147483647, %v150
    %vm161 = vcmp.eq.f32.partialorder %v160, 8.507059e+37
    %v162 = vand.u32 %v150, 2147483648
    %v163 = vor.u32 1.1754944e-38, %v162
    %v164 = vsel %vm161, %v163, %v159
    %v165 = vmul.f32 1.0, %v164
    %v166 = vld [vmem:[%s3] sm:$0xf]
    %v167 = vld [vmem:[%s3 + $0x4] sm:$0xf]
    %v170 = vunpack.c.l.b16 %v166
    %v171 = vunpack.c.l.b16 %v167
    %v172 = vpack.c.b16 %v171, %v170
    %vm174 = vcmask 130048
    %v176 = vsel %vm174, 1031814528, 0
    %178 = vmatpush.bf16.msra.mxu0 0
    %179 = vmatpush.bf16.msra.mxu0 0
    %180 = vmatpush.bf16.msra.mxu0 0
    %181 = vmatpush.bf16.msra.mxu0 0
    %182 = vmatpush.bf16.msra.mxu0 0
    %183 = vmatpush.bf16.msra.mxu0 0
    %184 = vmatpush.bf16.msra.mxu0 0
    %185 = vmatpush.bf16.msra.mxu0 %v172
    %186 = vmatmul.bf16.gmra.mxu0 %v176
    %v187 = vpop.f32.mrf.mxu0
    %v188 = vadd.f32 0.0, %v187
    %v189 = vpop.f32.mrf.mxu0
    %190 = vdwg.mxu0
    %v191 = vmul.f32 %v188, 0.85
    %v192 = vadd.f32 %v191, 0.009375
    %v193 = vpack.c.bf16 %v192, %v192
    %v195 = vsel %vm174, %v193, 0
    %197 = vmatpush.bf16.msra.mxu0 0
    %198 = vmatpush.bf16.msra.mxu0 0
    %199 = vmatpush.bf16.msra.mxu0 0
    %200 = vmatpush.bf16.msra.mxu0 0
    %201 = vmatpush.bf16.msra.mxu0 0
    %202 = vmatpush.bf16.msra.mxu0 0
    %203 = vmatpush.bf16.msra.mxu0 0
    %204 = vmatpush.bf16.msra.mxu0 %v172
    %205 = vmatmul.bf16.gmra.mxu0 %v195
    %v206 = vpop.f32.mrf.mxu0
    %v207 = vadd.f32 0.0, %v206
    %v208 = vpop.f32.mrf.mxu0
    %209 = vdwg.mxu0
    %v210 = vmul.f32 %v207, 0.85
    %v211 = vadd.f32 %v210, 0.009375
    %v212 = vpack.c.bf16 %v211, %v211
    %v214 = vsel %vm174, %v212, 0
    %216 = vmatpush.bf16.msra.mxu0 0
    %217 = vmatpush.bf16.msra.mxu0 0
    %218 = vmatpush.bf16.msra.mxu0 0
    %219 = vmatpush.bf16.msra.mxu0 0
    %220 = vmatpush.bf16.msra.mxu0 0
    %221 = vmatpush.bf16.msra.mxu0 0
    %222 = vmatpush.bf16.msra.mxu0 0
    %223 = vmatpush.bf16.msra.mxu0 %v172
    %224 = vmatmul.bf16.gmra.mxu0 %v214
    %v225 = vpop.f32.mrf.mxu0
    %v226 = vadd.f32 0.0, %v225
    %v227 = vpop.f32.mrf.mxu0
    %228 = vdwg.mxu0
    %v229 = vmul.f32 %v226, 0.85
    %v230 = vadd.f32 %v229, 0.009375
    %v231 = vpack.c.bf16 %v230, %v230
    %v233 = vsel %vm174, %v231, 0
    %235 = vmatpush.bf16.msra.mxu0 0
    %236 = vmatpush.bf16.msra.mxu0 0
    %237 = vmatpush.bf16.msra.mxu0 0
    %238 = vmatpush.bf16.msra.mxu0 0
    %239 = vmatpush.bf16.msra.mxu0 0
    %240 = vmatpush.bf16.msra.mxu0 0
    %241 = vmatpush.bf16.msra.mxu0 0
    %242 = vmatpush.bf16.msra.mxu0 %v172
    %243 = vmatmul.bf16.gmra.mxu0 %v233
    %v244 = vpop.f32.mrf.mxu0
    %v245 = vadd.f32 0.0, %v244
    %v246 = vpop.f32.mrf.mxu0
    %247 = vdwg.mxu0
    %v248 = vmul.f32 %v245, 0.85
    %v249 = vadd.f32 %v248, 0.009375
    %v250 = vpack.c.bf16 %v249, %v249
    %v252 = vsel %vm174, %v250, 0
    %254 = vmatpush.bf16.msra.mxu0 0
    %255 = vmatpush.bf16.msra.mxu0 0
    %256 = vmatpush.bf16.msra.mxu0 0
    %257 = vmatpush.bf16.msra.mxu0 0
    %258 = vmatpush.bf16.msra.mxu0 0
    %259 = vmatpush.bf16.msra.mxu0 0
    %260 = vmatpush.bf16.msra.mxu0 0
    %261 = vmatpush.bf16.msra.mxu0 %v172
    %262 = vmatmul.bf16.gmra.mxu0 %v252
    %v263 = vpop.f32.mrf.mxu0
    %v264 = vadd.f32 0.0, %v263
    %v265 = vpop.f32.mrf.mxu0
    %266 = vdwg.mxu0
    %v267 = vmul.f32 %v264, 0.85
    %v268 = vadd.f32 %v267, 0.009375
    %v269 = vpack.c.bf16 %v268, %v268
    %v271 = vsel %vm174, %v269, 0
    %273 = vmatpush.bf16.msra.mxu0 0
    %274 = vmatpush.bf16.msra.mxu0 0
    %275 = vmatpush.bf16.msra.mxu0 0
    %276 = vmatpush.bf16.msra.mxu0 0
    %277 = vmatpush.bf16.msra.mxu0 0
    %278 = vmatpush.bf16.msra.mxu0 0
    %279 = vmatpush.bf16.msra.mxu0 0
    %280 = vmatpush.bf16.msra.mxu0 %v172
    %281 = vmatmul.bf16.gmra.mxu0 %v271
    %v282 = vpop.f32.mrf.mxu0
    %v283 = vadd.f32 0.0, %v282
    %v284 = vpop.f32.mrf.mxu0
    %285 = vdwg.mxu0
    %v286 = vmul.f32 %v283, 0.85
    %v287 = vadd.f32 %v286, 0.009375
    %v288 = vpack.c.bf16 %v287, %v287
    %v290 = vsel %vm174, %v288, 0
    %292 = vmatpush.bf16.msra.mxu0 0
    %293 = vmatpush.bf16.msra.mxu0 0
    %294 = vmatpush.bf16.msra.mxu0 0
    %295 = vmatpush.bf16.msra.mxu0 0
    %296 = vmatpush.bf16.msra.mxu0 0
    %297 = vmatpush.bf16.msra.mxu0 0
    %298 = vmatpush.bf16.msra.mxu0 0
    %299 = vmatpush.bf16.msra.mxu0 %v172
    %300 = vmatmul.bf16.gmra.mxu0 %v290
    %v301 = vpop.f32.mrf.mxu0
    %v302 = vadd.f32 0.0, %v301
    %v303 = vpop.f32.mrf.mxu0
    %304 = vdwg.mxu0
    %v305 = vmul.f32 %v302, 0.85
    %v306 = vadd.f32 %v305, 0.009375
    %v307 = vpack.c.bf16 %v306, %v306
    %v309 = vsel %vm174, %v307, 0
    %311 = vmatpush.bf16.msra.mxu0 0
    %312 = vmatpush.bf16.msra.mxu0 0
    %313 = vmatpush.bf16.msra.mxu0 0
    %314 = vmatpush.bf16.msra.mxu0 0
    %315 = vmatpush.bf16.msra.mxu0 0
    %316 = vmatpush.bf16.msra.mxu0 0
    %317 = vmatpush.bf16.msra.mxu0 0
    %318 = vmatpush.bf16.msra.mxu0 %v172
    %319 = vmatmul.bf16.gmra.mxu0 %v309
    %v320 = vpop.f32.mrf.mxu0
    %v321 = vadd.f32 0.0, %v320
    %v322 = vpop.f32.mrf.mxu0
    %323 = vdwg.mxu0
    %v324 = vmul.f32 %v321, 0.85
    %v325 = vadd.f32 %v324, 0.009375
    %v326 = vpack.c.bf16 %v325, %v325
    %v328 = vsel %vm174, %v326, 0
    %330 = vmatpush.bf16.msra.mxu0 0
    %331 = vmatpush.bf16.msra.mxu0 0
    %332 = vmatpush.bf16.msra.mxu0 0
    %333 = vmatpush.bf16.msra.mxu0 0
    %334 = vmatpush.bf16.msra.mxu0 0
    %335 = vmatpush.bf16.msra.mxu0 0
    %336 = vmatpush.bf16.msra.mxu0 0
    %337 = vmatpush.bf16.msra.mxu0 %v172
    %338 = vmatmul.bf16.gmra.mxu0 %v328
    %v339 = vpop.f32.mrf.mxu0
    %v340 = vadd.f32 0.0, %v339
    %v341 = vpop.f32.mrf.mxu0
    %342 = vdwg.mxu0
    %v343 = vmul.f32 %v340, 0.85
    %v344 = vadd.f32 %v343, 0.009375
    %v345 = vpack.c.bf16 %v344, %v344
    %v347 = vsel %vm174, %v345, 0
    %349 = vmatpush.bf16.msra.mxu0 0
    %350 = vmatpush.bf16.msra.mxu0 0
    %351 = vmatpush.bf16.msra.mxu0 0
    %352 = vmatpush.bf16.msra.mxu0 0
    %353 = vmatpush.bf16.msra.mxu0 0
    %354 = vmatpush.bf16.msra.mxu0 0
    %355 = vmatpush.bf16.msra.mxu0 0
    %356 = vmatpush.bf16.msra.mxu0 %v172
    %357 = vmatmul.bf16.gmra.mxu0 %v347
    %v358 = vpop.f32.mrf.mxu0
    %v359 = vadd.f32 0.0, %v358
    %v360 = vpop.f32.mrf.mxu0
    %361 = vdwg.mxu0
    %v362 = vmul.f32 %v359, 0.85
    %v363 = vadd.f32 %v362, 0.009375
    %v364 = vmul.f32 %v363, 16.0
    %v365 = vxor.u32 %v364, 2147483648
    %v366 = vmul.f32 %v365, 1.442695
    %v367 = vpow.pop %v366
    %v368 = vadd.f32 %v367, 1.0
    %v369 = vrcp.pop %v368
    %v370 = vmul.f32 %v368, %v369
    %v371 = vsub.f32 1.0, %v370
    %v372 = vmul.f32 %v369, %v371
    %v373 = vadd.f32 %v369, %v372
    %vm374 = vweird.f32 %v368
    %vm375 = vweird.f32 %v369
    %vm376 = vmor %vm374, %vm375
    %v377 = vsel %vm376, %v369, %v373
    %v378 = vand.u32 2147483647, %v368
    %vm379 = vcmp.eq.f32.partialorder %v378, 8.507059e+37
    %v380 = vand.u32 %v368, 2147483648
    %v381 = vor.u32 1.1754944e-38, %v380
    %v382 = vsel %vm379, %v381, %v377
    %v383 = vmul.f32 1.0, %v382
    %v384 = vand.u32 2147483647, %v93
    %vm385 = vcmask 122880
    %v386 = vsel %vm385, %v384, -inf
    %387 = vmax.xlane.f32.xlu0 %v386
    %v388 = vpop.xlane.xlu0 %387
    %v389 = vrcp.pop %v388
    %v390 = vmul.f32 %v93, %v389
    %v391 = vand.u32 2147483647, %v165
    %v392 = vsel %vm385, %v391, -inf
    %393 = vmax.xlane.f32.xlu0 %v392
    %v394 = vpop.xlane.xlu0 %393
    %v395 = vrcp.pop %v394
    %v396 = vmul.f32 %v165, %v395
    %v397 = vand.u32 2147483647, %v383
    %v398 = vsel %vm385, %v397, -inf
    %399 = vmax.xlane.f32.xlu0 %v398
    %v400 = vpop.xlane.xlu0 %399
    %v401 = vrcp.pop %v400
    %v402 = vmul.f32 %v383, %v401
    %s403 = sld [smem:[#allocation5]]
    %v404 = vstv %s403
    %v405 = vmul.f32 %v390, %v404
    %s406 = sld [smem:[#allocation5 + $0x80]]
    %v407 = vstv %s406
    %v408 = vmul.f32 %v396, %v407
    %v409 = vadd.f32 %v405, %v408
    %s410 = sld [smem:[#allocation5 + $0x100]]
    %v411 = vstv %s410
    %v412 = vmul.f32 %v402, %v411
    %v413 = vadd.f32 %v409, %v412
    %s414 = sld [smem:[#allocation7]]
    %v415 = vstv %s414
    %v416 = vadd.f32 %v413, %v415
    %v417 = vxor.u32 %v416, 2147483648
    %v418 = vmul.f32 %v417, 1.442695
    %v419 = vpow.pop %v418
    %v420 = vadd.f32 %v419, 1.0
    %v421 = vrcp.pop %v420
    %v422 = vmul.f32 %v420, %v421
    %v423 = vsub.f32 1.0, %v422
    %v424 = vmul.f32 %v421, %v423
    %v425 = vadd.f32 %v421, %v424
    %vm426 = vweird.f32 %v420
    %vm427 = vweird.f32 %v421
    %vm428 = vmor %vm426, %vm427
    %v429 = vsel %vm428, %v421, %v425
    %v430 = vand.u32 2147483647, %v420
    %vm431 = vcmp.eq.f32.partialorder %v430, 8.507059e+37
    %v432 = vand.u32 %v420, 2147483648
    %v433 = vor.u32 1.1754944e-38, %v432
    %v434 = vsel %vm431, %v433, %v429
    %v435 = vmul.f32 1.0, %v434
    %s436 = sld [smem:[#allocation5 + $0x1]]
    %v437 = vstv %s436
    %v438 = vmul.f32 %v390, %v437
    %s439 = sld [smem:[#allocation5 + $0x81]]
    %v440 = vstv %s439
    %v441 = vmul.f32 %v396, %v440
    %v442 = vadd.f32 %v438, %v441
    %s443 = sld [smem:[#allocation5 + $0x101]]
    %v444 = vstv %s443
    %v445 = vmul.f32 %v402, %v444
    %v446 = vadd.f32 %v442, %v445
    %s447 = sld [smem:[#allocation7 + $0x1]]
    %v448 = vstv %s447
    %v449 = vadd.f32 %v446, %v448
    %v450 = vxor.u32 %v449, 2147483648
    %v451 = vmul.f32 %v450, 1.442695
    %v452 = vpow.pop %v451
    %v453 = vadd.f32 %v452, 1.0
    %v454 = vrcp.pop %v453
    %v455 = vmul.f32 %v453, %v454
    %v456 = vsub.f32 1.0, %v455
    %v457 = vmul.f32 %v454, %v456
    %v458 = vadd.f32 %v454, %v457
    %vm459 = vweird.f32 %v453
    %vm460 = vweird.f32 %v454
    %vm461 = vmor %vm459, %vm460
    %v462 = vsel %vm461, %v454, %v458
    %v463 = vand.u32 2147483647, %v453
    %vm464 = vcmp.eq.f32.partialorder %v463, 8.507059e+37
    %v465 = vand.u32 %v453, 2147483648
    %v466 = vor.u32 1.1754944e-38, %v465
    %v467 = vsel %vm464, %v466, %v462
    %v468 = vmul.f32 1.0, %v467
    %s469 = sld [smem:[#allocation5 + $0x2]]
    %v470 = vstv %s469
    %v471 = vmul.f32 %v390, %v470
    %s472 = sld [smem:[#allocation5 + $0x82]]
    %v473 = vstv %s472
    %v474 = vmul.f32 %v396, %v473
    %v475 = vadd.f32 %v471, %v474
    %s476 = sld [smem:[#allocation5 + $0x102]]
    %v477 = vstv %s476
    %v478 = vmul.f32 %v402, %v477
    %v479 = vadd.f32 %v475, %v478
    %s480 = sld [smem:[#allocation7 + $0x2]]
    %v481 = vstv %s480
    %v482 = vadd.f32 %v479, %v481
    %v483 = vxor.u32 %v482, 2147483648
    %v484 = vmul.f32 %v483, 1.442695
    %v485 = vpow.pop %v484
    %v486 = vadd.f32 %v485, 1.0
    %v487 = vrcp.pop %v486
    %v488 = vmul.f32 %v486, %v487
    %v489 = vsub.f32 1.0, %v488
    %v490 = vmul.f32 %v487, %v489
    %v491 = vadd.f32 %v487, %v490
    %vm492 = vweird.f32 %v486
    %vm493 = vweird.f32 %v487
    %vm494 = vmor %vm492, %vm493
    %v495 = vsel %vm494, %v487, %v491
    %v496 = vand.u32 2147483647, %v486
    %vm497 = vcmp.eq.f32.partialorder %v496, 8.507059e+37
    %v498 = vand.u32 %v486, 2147483648
    %v499 = vor.u32 1.1754944e-38, %v498
    %v500 = vsel %vm497, %v499, %v495
    %v501 = vmul.f32 1.0, %v500
    %v502 = vmax.f32 %v435, %v468
    %v503 = vmax.f32 %v502, %v501
    %v504 = vsub.f32 %v435, %v503
    %v505 = vmul.f32 %v504, 1.442695
    %v506 = vpow.pop %v505
    %v507 = vsub.f32 %v468, %v503
    %v508 = vmul.f32 %v507, 1.442695
    %v509 = vpow.pop %v508
    %v510 = vsub.f32 %v501, %v503
    %v511 = vmul.f32 %v510, 1.442695
    %v512 = vpow.pop %v511
    %v513 = vadd.f32 %v506, %v509
    %v514 = vadd.f32 %v513, %v512
    %v515 = vrcp.pop %v514
    %v516 = vmul.f32 %v390, %v506
    %v517 = vmul.f32 %v396, %v509
    %v518 = vadd.f32 %v516, %v517
    %v519 = vmul.f32 %v402, %v512
    %v520 = vadd.f32 %v518, %v519
    %v521 = vmul.f32 %v520, %v515
    %v522 = vxor.u32 %v521, 2147483648
    %v523 = vmul.f32 %v522, 1.442695
    %v524 = vpow.pop %v523
    %v525 = vadd.f32 %v524, 1.0
    %v526 = vrcp.pop %v525
    %v527 = vmul.f32 %v525, %v526
    %v528 = vsub.f32 1.0, %v527
    %v529 = vmul.f32 %v526, %v528
    %v530 = vadd.f32 %v526, %v529
    %vm531 = vweird.f32 %v525
    %vm532 = vweird.f32 %v526
    %vm533 = vmor %vm531, %vm532
    %v534 = vsel %vm533, %v526, %v530
    %v535 = vand.u32 2147483647, %v525
    %vm536 = vcmp.eq.f32.partialorder %v535, 8.507059e+37
    %v537 = vand.u32 %v525, 2147483648
    %v538 = vor.u32 1.1754944e-38, %v537
    %v539 = vsel %vm536, %v538, %v534
    %v540 = vmul.f32 1.0, %v539
    %541 = vst.msk [vmem:[#allocation8] sm:$0x1] %vm385, %v540
    // Predicated region
    $region42: #{tpu_custom_call.1} parent=1 // pred_check
      _
    $region43: #{tpu_custom_call.1} parent=1 // pred_check_branch
      %543 = sbr.rel (0) target = $region45
    $region44: #{tpu_custom_call.1} parent=1 // pred_region
      %545 = vsyncadd [#allocation3], 0
      %s547 = sshll.u32 [#allocation8], 4
      %s548 = int_to_ptr.vmem [resolvable:$true] %s547
      %s549 = sshll.u32 %s7, 4
      %s550 = int_to_ptr.hbm [resolvable:$true] %s549
      %552 = dma.vmem_to_hbm [thread:$0]  %s548, 16, %s550, [#allocation3]
    $region45: #{tpu_custom_call.1} parent=1 // pred_fallthru
      _
    // Predicated region
    $region46: #{tpu_custom_call.1} parent=1 // pred_check
      _
    $region47: #{tpu_custom_call.1} parent=1 // pred_check_branch
      %554 = sbr.rel (0) target = $region49
    $region48: #{tpu_custom_call.1} parent=1 // pred_region
      %556 = dma.done [#allocation3], 16
    $region49: #{tpu_custom_call.1} parent=1 // pred_fallthru
      _
    %557 = vsyncpa [#allocation3], 1
    %558 = vsyncpa [#allocation4], 1
    %559 = vsyncpa [#allocation6], 1

</llo_original>
